<compile_context>
chip_gen: v5e
topology: v5e:2x2
jax: 0.10.0
libtpu: 0.0.40
codegen_flags: <defaults>
</compile_context>

<pallas_src>
import functools

import jax
import jax.numpy as jnp
from jax.experimental import pallas as pl
from jax.experimental.pallas import tpu as pltpu


def _round_up(x, m):
    return (x + m - 1) // m * m


def _device_kind():
    try:
        return jax.devices()[0].device_kind.lower()
    except Exception:
        return ""


def _num_tensorcores():
    # v7x has 2 TensorCores per chip; v5e / v6e have 1.
    return 2 if "v7" in _device_kind() else 1


def _vmem_budget_bytes():
    cap = 128 * 1024 * 1024
    try:
        cap = int(pltpu.get_tpu_info().vmem_capacity_bytes)
    except Exception:
        pass
    if cap <= 64 * 1024 * 1024:
        # v7x-class: 64 MiB per TC; leave headroom for compiler-internal scratch.
        return 48 * 1024 * 1024
    # v5e / v6e: 128 MiB physical; allow well past the default scoped limit.
    return 100 * 1024 * 1024


def _padded_tile_bytes(shape, dtype):
    """VMEM footprint of a 2-D block after (sublane, lane) tile padding."""
    r, c = (1, shape[0]) if len(shape) == 1 else shape[-2:]
    itemsize = jnp.dtype(dtype).itemsize
    sub = max(8, 32 // itemsize)          # f32 -> 8 rows, bf16 -> 16, int8 -> 32
    return _round_up(r, sub) * _round_up(c, 128) * itemsize


# ----------------------------------------------------------------------------
# Fused kernel: whole MLP for one batch tile, batch-in-lanes.
#   x_ref : (dim_in, tm)      activations, batch along lanes
#   refs  : w_0 .. w_{nl-1}   (dim_h, fan_in) PyTorch-layout weights
#           aux               (dim_h, nl+2): bias columns | w_out column | b_out
#           o_ref             (1, tm) lane-dense output
# ----------------------------------------------------------------------------
def _fused_mlp_kernel(x_ref, *refs, num_linears):
    o_ref, aux_ref = refs[-1], refs[-2]
    w_refs = refs[:-2]

    h = x_ref[...]                               # (dim_in, tm)
    cdt = h.dtype
    aux = aux_ref[...].astype(jnp.float32)       # (dim_h, nl + 2)

    # Hidden stack + classifier: y = W @ h + b ; ReLU.  MXU matmul with f32
    # accumulation; activations stay in VMEM/vregs across layers (no HBM trip).
    for li in range(num_linears):
        w = w_refs[li][...]                      # (dim_h, fan_in)
        y = jnp.dot(w, h, preferred_element_type=jnp.float32)   # (dim_h, tm)
        y = y + aux[:, li:li + 1]                # bias broadcast along lanes
        h = jnp.maximum(y, 0.0).astype(cdt)

    # Output head (dim_h -> 1): VPU multiply + sublane reduce -> (1, tm),
    # already lane-dense (no degenerate N=1 matmul, no lane-sparse store).
    w_out_col = aux[:, num_linears:num_linears + 1]            # (dim_h, 1)
    b_out = aux[0:1, num_linears + 1:num_linears + 2]          # (1, 1)
    z = jnp.sum(h.astype(jnp.float32) * w_out_col, axis=0, keepdims=True) + b_out
    o_ref[...] = jax.nn.sigmoid(z).astype(o_ref.dtype)


def _const_specs(shapes, single_buffer):
    """Constant-index_map full-block specs; single-buffered when supported."""
    specs = []
    for shp in shapes:
        idx_map = (lambda n: (lambda i: (0,) * n))(len(shp))
        if single_buffer:
            try:
                specs.append(pl.BlockSpec(shp, idx_map,
                                          pipeline_mode=pl.Buffered(1)))
                continue
            except Exception:
                pass
        specs.append(pl.BlockSpec(shp, idx_map))
    return specs


# ----------------------------------------------------------------------------
# Wrapper: layout plumbing (transpose / pad / pack), tiling, VMEM budget.
# ----------------------------------------------------------------------------
def mlp_forward(params, x, *, tm=None):
    """Fused MLP forward. x: (M, dim_in) -> (M, 1) in x.dtype."""
    M, dim_in = x.shape
    dtype = x.dtype

    linears = list(params["layers"]) + [params["classifier"]]
    num_linears = len(linears)
    dim_h = params["classifier"][0].shape[0]
    w_out, b_out = params["output"]

    # Batch tiling: big lane-dense tiles, balanced to minimize tail padding,
    # and at least one tile per TensorCore (v7x has 2).
    lane = 128
    tm_target = tm if tm is not None else 2048
    min_tiles = _num_tensorcores() if M >= 2 * lane else 1
    n_tiles = max(pl.cdiv(M, tm_target), min_tiles)
    tm_eff = max(lane, _round_up(pl.cdiv(M, n_tiles), lane))
    m_pad = n_tiles * tm_eff

    # Batch-in-lanes: x^T (dim_in, m_pad).  Pure layout plumbing.
    xT = x.T
    if m_pad != M:
        xT = jnp.pad(xT, ((0, 0), (0, m_pad - M)))

    # Pack all biases + output-weight row + output bias into ONE operand.
    cols = [b.reshape(-1).astype(dtype) for (_w, b) in linears]       # nl x (dim_h,)
    cols.append(w_out.reshape(-1).astype(dtype))                      # (dim_h,)
    cols.append(jnp.zeros((dim_h,), dtype).at[0].set(
        b_out.reshape(-1)[0].astype(dtype)))                          # (dim_h,)
    aux = jnp.stack(cols, axis=1)                                     # (dim_h, nl+2)

    weights = [w.astype(dtype) for (w, _b) in linears]                # (dim_h, fan_in)

    x_spec = pl.BlockSpec((dim_in, tm_eff), lambda i: (0, i))
    out_spec = pl.BlockSpec((1, tm_eff), lambda i: (0, i))

    # VMEM budget: double-buffered x/out tiles + single-buffered params
    # + activation slack, clamped to the per-generation budget.
    param_bytes = sum(_padded_tile_bytes(w.shape, dtype) for w in weights)
    param_bytes += _padded_tile_bytes(aux.shape, dtype)
    est = (2 * (_padded_tile_bytes((dim_in, tm_eff), dtype)
                + _padded_tile_bytes((1, tm_eff), dtype))
           + param_bytes
           + 4 * _round_up(dim_h, 8) * tm_eff * 4)
    vmem_limit = int(min(max(2 * est, 32 * 1024 * 1024), _vmem_budget_bytes()))

    kernel = functools.partial(_fused_mlp_kernel, num_linears=num_linears)

    def run(single_buffer):
        in_specs = ([x_spec]
                    + _const_specs([w.shape for w in weights] + [aux.shape],
                                   single_buffer))
        return pl.pallas_call(
            kernel,
            out_shape=jax.ShapeDtypeStruct((1, m_pad), dtype),
            grid=(n_tiles,),
            in_specs=in_specs,
            out_specs=out_spec,
            compiler_params=pltpu.CompilerParams(
                dimension_semantics=("parallel",),   # shard batch tiles across TCs
                vmem_limit_bytes=vmem_limit,
            ),
        )(xT, *weights, aux)

    try:
        out_pad = run(single_buffer=True)
    except Exception:
        # Fallback for jax versions without pipeline_mode= / pl.Buffered(1).
        out_pad = run(single_buffer=False)

    return out_pad[0, :M].reshape(M, 1)


# ----------------------------------------------------------------------------
# Parameters (PyTorch Linear-style init, PyTorch (fan_out, fan_in) layout)
# + pure-JAX reference for correctness checking.
# ----------------------------------------------------------------------------
def init_mlp_params(key, dim_in, dim_h, num_layers, dtype=jnp.float32):
    def make_linear(k, fan_in, fan_out):
        kw, kb = jax.random.split(k)
        bound = 1.0 / float(fan_in) ** 0.5
        w = jax.random.uniform(kw, (fan_out, fan_in), jnp.float32, -bound, bound)
        b = jax.random.uniform(kb, (fan_out,), jnp.float32, -bound, bound)
        return w.astype(dtype), b.astype(dtype)

    keys = jax.random.split(key, num_layers + 2)
    params = {"layers": [], "classifier": None, "output": None}
    for i in range(num_layers):
        fi = dim_in if i == 0 else dim_h
        params["layers"].append(make_linear(keys[i], fi, dim_h))
    params["classifier"] = make_linear(keys[num_layers], dim_h, dim_h)
    params["output"] = make_linear(keys[num_layers + 1], dim_h, 1)
    return params


def mlp_forward_ref(params, x):
    h = x.astype(jnp.float32)

    def lin(h, w, b):
        return (jnp.dot(h, w.astype(jnp.float32).T,
                        precision=jax.lax.Precision.HIGHEST)
                + b.astype(jnp.float32))

    for w, b in params["layers"]:
        h = jnp.maximum(lin(h, w, b), 0.0)
    w, b = params["classifier"]
    h = jnp.maximum(lin(h, w, b), 0.0)
    w, b = params["output"]
    return jax.nn.sigmoid(lin(h, w, b))


if __name__ == "__main__":
    dim_in, dim_h, num_layers = 16, 32, 2
    batch = 300   # deliberately NOT a tile multiple: exercises padding path

    key = jax.random.PRNGKey(0)
    k_params, k_x = jax.random.split(key)
    params = init_mlp_params(k_params, dim_in, dim_h, num_layers, dtype=jnp.float32)
    x = jax.random.normal(k_x, (batch, dim_in), jnp.float32)

    ref = mlp_forward_ref(params, x)

    # f32 path: tight check against the pure-JAX reference.
    out = jax.block_until_ready(mlp_forward(params, x))
    assert out.shape == (batch, 1), out.shape
    assert jnp.allclose(out, ref, atol=1e-4, rtol=1e-4), "f32 mismatch vs reference"

    # bf16 storage/compute path (MXU-native on v6e/v7x), f32 accumulation.
    params_bf16 = jax.tree_util.tree_map(lambda a: a.astype(jnp.bfloat16), params)
    x_bf16 = x.astype(jnp.bfloat16)
    out_bf16 = jax.block_until_ready(mlp_forward(params_bf16, x_bf16))
    assert out_bf16.shape == (batch, 1), out_bf16.shape
    assert jnp.allclose(out_bf16.astype(jnp.float32), ref, atol=2e-2, rtol=2e-2), \
        "bf16 mismatch vs reference"

    print("KERNEL_OK")
</pallas_src>

<mosaic_0001>
module attributes {stable_mosaic.version = 11 : i64} {
  func.func @_fused_mlp_kernel(%arg0: i32, %arg1: memref<16x384xf32, #tpu.memory_space<vmem>>, %arg2: memref<32x16xf32, #tpu.memory_space<vmem>>, %arg3: memref<32x32xf32, #tpu.memory_space<vmem>>, %arg4: memref<32x32xf32, #tpu.memory_space<vmem>>, %arg5: memref<32x5xf32, #tpu.memory_space<vmem>>, %arg6: memref<1x384xf32, #tpu.memory_space<vmem>>) attributes {dimension_semantics = [#tpu.dimension_semantics<parallel>], iteration_bounds = array<i64: 1>, scalar_prefetch = 0 : i64, scratch_operands = 0 : i64, tpu.core_type = #tpu.core_type<tc>, window_params = [{transform_indices = @transform_0, window_bounds = array<i64: 16, 384>}, {pipeline_mode = #tpu.pipeline_mode<synchronous>, transform_indices = @transform_1, window_bounds = array<i64: 32, 16>}, {pipeline_mode = #tpu.pipeline_mode<synchronous>, transform_indices = @transform_2, window_bounds = array<i64: 32, 32>}, {pipeline_mode = #tpu.pipeline_mode<synchronous>, transform_indices = @transform_3, window_bounds = array<i64: 32, 32>}, {pipeline_mode = #tpu.pipeline_mode<synchronous>, transform_indices = @transform_4, window_bounds = array<i64: 32, 5>}, {transform_indices = @transform_5, window_bounds = array<i64: 1, 384>}]} {
    %c0 = arith.constant 0 : index
    %c0_0 = arith.constant 0 : index
    %0 = vector.load %arg1[%c0, %c0_0] : memref<16x384xf32, #tpu.memory_space<vmem>>, vector<16x384xf32>
    %c0_1 = arith.constant 0 : index
    %c0_2 = arith.constant 0 : index
    %1 = vector.load %arg5[%c0_1, %c0_2] : memref<32x5xf32, #tpu.memory_space<vmem>>, vector<32x5xf32>
    %c0_3 = arith.constant 0 : index
    %c0_4 = arith.constant 0 : index
    %2 = vector.load %arg2[%c0_3, %c0_4] : memref<32x16xf32, #tpu.memory_space<vmem>>, vector<32x16xf32>
    %cst = arith.constant dense<0.000000e+00> : vector<32x384xf32>
    %3 = tpu.matmul %2, %0, %cst {dimension_numbers = #tpu.dot_dimension_numbers<[1], [0], [0], [1], [0, 0, 1, 1], [], []>} : vector<32x16xf32>, vector<16x384xf32>, vector<32x384xf32> -> vector<32x384xf32>
    %4 = vector.extract_strided_slice %1 {offsets = [0, 0], sizes = [32, 1], strides = [1, 1]} : vector<32x5xf32> to vector<32x1xf32>
    %5 = vector.broadcast %4 : vector<32x1xf32> to vector<32x384xf32>
    %6 = arith.addf %3, %5 : vector<32x384xf32>
    %cst_5 = arith.constant 0.000000e+00 : f32
    %7 = vector.broadcast %cst_5 : f32 to vector<32x384xf32>
    %8 = arith.maximumf %6, %7 : vector<32x384xf32>
    %c0_6 = arith.constant 0 : index
    %c0_7 = arith.constant 0 : index
    %9 = vector.load %arg3[%c0_6, %c0_7] : memref<32x32xf32, #tpu.memory_space<vmem>>, vector<32x32xf32>
    %cst_8 = arith.constant dense<0.000000e+00> : vector<32x384xf32>
    %10 = tpu.matmul %9, %8, %cst_8 {dimension_numbers = #tpu.dot_dimension_numbers<[1], [0], [0], [1], [0, 0, 1, 1], [], []>} : vector<32x32xf32>, vector<32x384xf32>, vector<32x384xf32> -> vector<32x384xf32>
    %11 = vector.extract_strided_slice %1 {offsets = [0, 1], sizes = [32, 1], strides = [1, 1]} : vector<32x5xf32> to vector<32x1xf32>
    %12 = vector.broadcast %11 : vector<32x1xf32> to vector<32x384xf32>
    %13 = arith.addf %10, %12 : vector<32x384xf32>
    %cst_9 = arith.constant 0.000000e+00 : f32
    %14 = vector.broadcast %cst_9 : f32 to vector<32x384xf32>
    %15 = arith.maximumf %13, %14 : vector<32x384xf32>
    %c0_10 = arith.constant 0 : index
    %c0_11 = arith.constant 0 : index
    %16 = vector.load %arg4[%c0_10, %c0_11] : memref<32x32xf32, #tpu.memory_space<vmem>>, vector<32x32xf32>
    %cst_12 = arith.constant dense<0.000000e+00> : vector<32x384xf32>
    %17 = tpu.matmul %16, %15, %cst_12 {dimension_numbers = #tpu.dot_dimension_numbers<[1], [0], [0], [1], [0, 0, 1, 1], [], []>} : vector<32x32xf32>, vector<32x384xf32>, vector<32x384xf32> -> vector<32x384xf32>
    %18 = vector.extract_strided_slice %1 {offsets = [0, 2], sizes = [32, 1], strides = [1, 1]} : vector<32x5xf32> to vector<32x1xf32>
    %19 = vector.broadcast %18 : vector<32x1xf32> to vector<32x384xf32>
    %20 = arith.addf %17, %19 : vector<32x384xf32>
    %cst_13 = arith.constant 0.000000e+00 : f32
    %21 = vector.broadcast %cst_13 : f32 to vector<32x384xf32>
    %22 = arith.maximumf %20, %21 : vector<32x384xf32>
    %23 = vector.extract_strided_slice %1 {offsets = [0, 3], sizes = [32, 1], strides = [1, 1]} : vector<32x5xf32> to vector<32x1xf32>
    %24 = vector.extract_strided_slice %1 {offsets = [0, 4], sizes = [1, 1], strides = [1, 1]} : vector<32x5xf32> to vector<1x1xf32>
    %25 = vector.broadcast %23 : vector<32x1xf32> to vector<32x384xf32>
    %26 = arith.mulf %22, %25 : vector<32x384xf32>
    %cst_14 = arith.constant dense<0.000000e+00> : vector<384xf32>
    %27 = vector.multi_reduction <add>, %26, %cst_14 [0] : vector<32x384xf32> to vector<384xf32>
    %28 = vector.shape_cast %27 : vector<384xf32> to vector<1x384xf32>
    %29 = vector.broadcast %24 : vector<1x1xf32> to vector<1x384xf32>
    %30 = arith.addf %28, %29 : vector<1x384xf32>
    %31 = arith.negf %30 : vector<1x384xf32>
    %32 = math.exp %31 : vector<1x384xf32>
    %cst_15 = arith.constant 1.000000e+00 : f32
    %33 = vector.broadcast %cst_15 : f32 to vector<1x384xf32>
    %34 = arith.addf %33, %32 : vector<1x384xf32>
    %35 = arith.divf %33, %34 : vector<1x384xf32>
    %c0_16 = arith.constant 0 : index
    %c0_17 = arith.constant 0 : index
    %36 = vector.load %arg6[%c0_16, %c0_17] : memref<1x384xf32, #tpu.memory_space<vmem>>, vector<1x384xf32>
    tpu.vector_store %arg6[%c0_16, %c0_17], %35 {strides = array<i32>} : memref<1x384xf32, #tpu.memory_space<vmem>>, vector<1x384xf32>,
    return
  }
  func.func @transform_0(%arg0: i32) -> (i32, i32) {
    %c0_i32 = arith.constant 0 : i32
    %c0_i32_0 = arith.constant 0 : i32
    return %c0_i32, %arg0 : i32, i32
  }
  func.func @transform_1(%arg0: i32) -> (i32, i32) {
    %c0_i32 = arith.constant 0 : i32
    %c0_i32_0 = arith.constant 0 : i32
    %c0_i32_1 = arith.constant 0 : i32
    return %c0_i32, %c0_i32_0 : i32, i32
  }
  func.func @transform_2(%arg0: i32) -> (i32, i32) {
    %c0_i32 = arith.constant 0 : i32
    %c0_i32_0 = arith.constant 0 : i32
    %c0_i32_1 = arith.constant 0 : i32
    return %c0_i32, %c0_i32_0 : i32, i32
  }
  func.func @transform_3(%arg0: i32) -> (i32, i32) {
    %c0_i32 = arith.constant 0 : i32
    %c0_i32_0 = arith.constant 0 : i32
    %c0_i32_1 = arith.constant 0 : i32
    return %c0_i32, %c0_i32_0 : i32, i32
  }
  func.func @transform_4(%arg0: i32) -> (i32, i32) {
    %c0_i32 = arith.constant 0 : i32
    %c0_i32_0 = arith.constant 0 : i32
    %c0_i32_1 = arith.constant 0 : i32
    return %c0_i32, %c0_i32_0 : i32, i32
  }
  func.func @transform_5(%arg0: i32) -> (i32, i32) {
    %c0_i32 = arith.constant 0 : i32
    %c0_i32_0 = arith.constant 0 : i32
    return %c0_i32, %arg0 : i32, i32
  }
}

module attributes {stable_mosaic.version = 11 : i64} {
  func.func @_fused_mlp_kernel(%arg0: i32, %arg1: memref<16x384xf32, #tpu.memory_space<vmem>>, %arg2: memref<32x16xf32, #tpu.memory_space<vmem>>, %arg3: memref<32x32xf32, #tpu.memory_space<vmem>>, %arg4: memref<32x32xf32, #tpu.memory_space<vmem>>, %arg5: memref<32x5xf32, #tpu.memory_space<vmem>>, %arg6: memref<1x384xf32, #tpu.memory_space<vmem>>) attributes {dimension_semantics = [#tpu.dimension_semantics<parallel>], iteration_bounds = array<i64: 1>, scalar_prefetch = 0 : i64, scratch_operands = 0 : i64, tpu.core_type = #tpu.core_type<tc>, window_params = [{transform_indices = @transform_0, window_bounds = array<i64: 16, 384>}, {pipeline_mode = #tpu.pipeline_mode<synchronous>, transform_indices = @transform_1, window_bounds = array<i64: 32, 16>}, {pipeline_mode = #tpu.pipeline_mode<synchronous>, transform_indices = @transform_2, window_bounds = array<i64: 32, 32>}, {pipeline_mode = #tpu.pipeline_mode<synchronous>, transform_indices = @transform_3, window_bounds = array<i64: 32, 32>}, {pipeline_mode = #tpu.pipeline_mode<synchronous>, transform_indices = @transform_4, window_bounds = array<i64: 32, 5>}, {transform_indices = @transform_5, window_bounds = array<i64: 1, 384>}]} {
    %c0 = arith.constant 0 : index
    %c0_0 = arith.constant 0 : index
    %0 = vector.load %arg1[%c0, %c0_0] : memref<16x384xf32, #tpu.memory_space<vmem>>, vector<16x384xf32>
    %c0_1 = arith.constant 0 : index
    %c0_2 = arith.constant 0 : index
    %1 = vector.load %arg5[%c0_1, %c0_2] : memref<32x5xf32, #tpu.memory_space<vmem>>, vector<32x5xf32>
    %c0_3 = arith.constant 0 : index
    %c0_4 = arith.constant 0 : index
    %2 = vector.load %arg2[%c0_3, %c0_4] : memref<32x16xf32, #tpu.memory_space<vmem>>, vector<32x16xf32>
    %cst = arith.constant dense<0.000000e+00> : vector<32x384xf32>
    %3 = tpu.matmul %2, %0, %cst {dimension_numbers = #tpu.dot_dimension_numbers<[1], [0], [0], [1], [0, 0, 1, 1], [], []>} : vector<32x16xf32>, vector<16x384xf32>, vector<32x384xf32> -> vector<32x384xf32>
    %4 = vector.extract_strided_slice %1 {offsets = [0, 0], sizes = [32, 1], strides = [1, 1]} : vector<32x5xf32> to vector<32x1xf32>
    %5 = vector.broadcast %4 : vector<32x1xf32> to vector<32x384xf32>
    %6 = arith.addf %3, %5 : vector<32x384xf32>
    %cst_5 = arith.constant 0.000000e+00 : f32
    %7 = vector.broadcast %cst_5 : f32 to vector<32x384xf32>
    %8 = arith.maximumf %6, %7 : vector<32x384xf32>
    %c0_6 = arith.constant 0 : index
    %c0_7 = arith.constant 0 : index
    %9 = vector.load %arg3[%c0_6, %c0_7] : memref<32x32xf32, #tpu.memory_space<vmem>>, vector<32x32xf32>
    %cst_8 = arith.constant dense<0.000000e+00> : vector<32x384xf32>
    %10 = tpu.matmul %9, %8, %cst_8 {dimension_numbers = #tpu.dot_dimension_numbers<[1], [0], [0], [1], [0, 0, 1, 1], [], []>} : vector<32x32xf32>, vector<32x384xf32>, vector<32x384xf32> -> vector<32x384xf32>
    %11 = vector.extract_strided_slice %1 {offsets = [0, 1], sizes = [32, 1], strides = [1, 1]} : vector<32x5xf32> to vector<32x1xf32>
    %12 = vector.broadcast %11 : vector<32x1xf32> to vector<32x384xf32>
    %13 = arith.addf %10, %12 : vector<32x384xf32>
    %cst_9 = arith.constant 0.000000e+00 : f32
    %14 = vector.broadcast %cst_9 : f32 to vector<32x384xf32>
    %15 = arith.maximumf %13, %14 : vector<32x384xf32>
    %c0_10 = arith.constant 0 : index
    %c0_11 = arith.constant 0 : index
    %16 = vector.load %arg4[%c0_10, %c0_11] : memref<32x32xf32, #tpu.memory_space<vmem>>, vector<32x32xf32>
    %cst_12 = arith.constant dense<0.000000e+00> : vector<32x384xf32>
    %17 = tpu.matmul %16, %15, %cst_12 {dimension_numbers = #tpu.dot_dimension_numbers<[1], [0], [0], [1], [0, 0, 1, 1], [], []>} : vector<32x32xf32>, vector<32x384xf32>, vector<32x384xf32> -> vector<32x384xf32>
    %18 = vector.extract_strided_slice %1 {offsets = [0, 2], sizes = [32, 1], strides = [1, 1]} : vector<32x5xf32> to vector<32x1xf32>
    %19 = vector.broadcast %18 : vector<32x1xf32> to vector<32x384xf32>
    %20 = arith.addf %17, %19 : vector<32x384xf32>
    %cst_13 = arith.constant 0.000000e+00 : f32
    %21 = vector.broadcast %cst_13 : f32 to vector<32x384xf32>
    %22 = arith.maximumf %20, %21 : vector<32x384xf32>
    %23 = vector.extract_strided_slice %1 {offsets = [0, 3], sizes = [32, 1], strides = [1, 1]} : vector<32x5xf32> to vector<32x1xf32>
    %24 = vector.extract_strided_slice %1 {offsets = [0, 4], sizes = [1, 1], strides = [1, 1]} : vector<32x5xf32> to vector<1x1xf32>
    %25 = vector.broadcast %23 : vector<32x1xf32> to vector<32x384xf32>
    %26 = arith.mulf %22, %25 : vector<32x384xf32>
    %cst_14 = arith.constant dense<0.000000e+00> : vector<384xf32>
    %27 = vector.multi_reduction <add>, %26, %cst_14 [0] : vector<32x384xf32> to vector<384xf32>
    %28 = vector.shape_cast %27 : vector<384xf32> to vector<1x384xf32>
    %29 = vector.broadcast %24 : vector<1x1xf32> to vector<1x384xf32>
    %30 = arith.addf %28, %29 : vector<1x384xf32>
    %31 = arith.negf %30 : vector<1x384xf32>
    %32 = math.exp %31 : vector<1x384xf32>
    %cst_15 = arith.constant 1.000000e+00 : f32
    %33 = vector.broadcast %cst_15 : f32 to vector<1x384xf32>
    %34 = arith.addf %33, %32 : vector<1x384xf32>
    %35 = arith.divf %33, %34 : vector<1x384xf32>
    %c0_16 = arith.constant 0 : index
    %c0_17 = arith.constant 0 : index
    %36 = vector.load %arg6[%c0_16, %c0_17] : memref<1x384xf32, #tpu.memory_space<vmem>>, vector<1x384xf32>
    tpu.vector_store %arg6[%c0_16, %c0_17], %35 {strides = array<i32>} : memref<1x384xf32, #tpu.memory_space<vmem>>, vector<1x384xf32>,
    return
  }
  func.func @transform_0(%arg0: i32) -> (i32, i32) {
    %c0_i32 = arith.constant 0 : i32
    %c0_i32_0 = arith.constant 0 : i32
    return %c0_i32, %arg0 : i32, i32
  }
  func.func @transform_1(%arg0: i32) -> (i32, i32) {
    %c0_i32 = arith.constant 0 : i32
    %c0_i32_0 = arith.constant 0 : i32
    %c0_i32_1 = arith.constant 0 : i32
    return %c0_i32, %c0_i32_0 : i32, i32
  }
  func.func @transform_2(%arg0: i32) -> (i32, i32) {
    %c0_i32 = arith.constant 0 : i32
    %c0_i32_0 = arith.constant 0 : i32
    %c0_i32_1 = arith.constant 0 : i32
    return %c0_i32, %c0_i32_0 : i32, i32
  }
  func.func @transform_3(%arg0: i32) -> (i32, i32) {
    %c0_i32 = arith.constant 0 : i32
    %c0_i32_0 = arith.constant 0 : i32
    %c0_i32_1 = arith.constant 0 : i32
    return %c0_i32, %c0_i32_0 : i32, i32
  }
  func.func @transform_4(%arg0: i32) -> (i32, i32) {
    %c0_i32 = arith.constant 0 : i32
    %c0_i32_0 = arith.constant 0 : i32
    %c0_i32_1 = arith.constant 0 : i32
    return %c0_i32, %c0_i32_0 : i32, i32
  }
  func.func @transform_5(%arg0: i32) -> (i32, i32) {
    %c0_i32 = arith.constant 0 : i32
    %c0_i32_0 = arith.constant 0 : i32
    return %c0_i32, %arg0 : i32, i32
  }
}

</mosaic_0001>

<llo_original>
// kernel: tpu_custom_call.1
$region0: #{tpu_custom_call.1}
  #allocation0 [shape = 'u32[]', space=smem, size = 0x4, offset = 0x4, fixed_abs, tag = 'smem constant byte address 0x4 - core index']
  #allocation1 [shape = 'u32[72,128]{1,0:T(1,128)}', space=vmem, size = 0x9000, scoped, tag = 'internal scratch']
  %s0 = inlined_call_operand.vmem [shape: f32[16,384], index: 0, kind: input, shape index: {}]
  %s1 = inlined_call_operand.vmem [shape: f32[32,16], index: 1, kind: input, shape index: {}]
  %s2 = inlined_call_operand.vmem [shape: f32[32,32], index: 2, kind: input, shape index: {}]
  %s3 = inlined_call_operand.hbm [shape: f32[32,32], index: 3, kind: input, shape index: {}]
  %s4 = inlined_call_operand.vmem [shape: f32[32,5], index: 4, kind: input, shape index: {}]
  %s5 = inlined_call_operand.hbm [shape: f32[1,384], index: 5, kind: output, shape index: {}]
  %s6 = sld [smem:[#allocation0]]
  $region34: #{tpu_custom_call.1} parent=0
    _
  %s8 = ssub.s32 1, %s6
  %s9 = scalar_select 0, %s8, %s6
  $region1: #{tpu_custom_call.1} parent=0
    #allocation2 [shape = 'u8[16384]{0}', space=vmem, size = 0x4000, scoped, tag = 'input window, operand 3, single buffered']
    #allocation3 [shape = 's32[1]{0}', space=sflag, size = 0x4, scoped, tag = 'scoped memory for tpu_custom_call.1']
    #allocation4 [shape = 's32[1]{0}', space=sflag, size = 0x4, scoped, tag = 'scoped memory for tpu_custom_call.1']
    #allocation5 [shape = 'u8[1536]{0}', space=vmem, size = 0x800, scoped, tag = 'output window, operand 0, single buffered']
    %10 = vsyncpa [#allocation3], 0
    %11 = vsyncpa [#allocation4], 0
    // Predicated region
    $region2: #{tpu_custom_call.1} parent=1 // pred_check
      _
    $region3: #{tpu_custom_call.1} parent=1 // pred_check_branch
      %13 = sbr.rel (0) target = $region5
    $region4: #{tpu_custom_call.1} parent=1 // pred_region
      _
    $region5: #{tpu_custom_call.1} parent=1 // pred_fallthru
      _
    // Predicated region
    $region6: #{tpu_custom_call.1} parent=1 // pred_check
      _
    $region7: #{tpu_custom_call.1} parent=1 // pred_check_branch
      %15 = sbr.rel (0) target = $region9
    $region8: #{tpu_custom_call.1} parent=1 // pred_region
      _
    $region9: #{tpu_custom_call.1} parent=1 // pred_fallthru
      _
    // Predicated region
    $region10: #{tpu_custom_call.1} parent=1 // pred_check
      _
    $region11: #{tpu_custom_call.1} parent=1 // pred_check_branch
      %17 = sbr.rel (0) target = $region13
    $region12: #{tpu_custom_call.1} parent=1 // pred_region
      _
    $region13: #{tpu_custom_call.1} parent=1 // pred_fallthru
      _
    // Predicated region
    $region14: #{tpu_custom_call.1} parent=1 // pred_check
      _
    $region15: #{tpu_custom_call.1} parent=1 // pred_check_branch
      %19 = sbr.rel (0) target = $region17
    $region16: #{tpu_custom_call.1} parent=1 // pred_region
      %21 = vsyncadd [#allocation3], 0
      %s22 = sshll.u32 %s3, 4
      %s23 = int_to_ptr.hbm [resolvable:$true] %s22
      %s24 = sshll.u32 [#allocation2], 4
      %s25 = int_to_ptr.vmem [resolvable:$true] %s24
      %30 = dma.hbm_to_vmem [thread:$0]  %s23, 512, %s25, [#allocation3], 128, 128, 8
    $region17: #{tpu_custom_call.1} parent=1 // pred_fallthru
      _
    // Predicated region
    $region18: #{tpu_custom_call.1} parent=1 // pred_check
      _
    $region19: #{tpu_custom_call.1} parent=1 // pred_check_branch
      %32 = sbr.rel (0) target = $region21
    $region20: #{tpu_custom_call.1} parent=1 // pred_region
      _
    $region21: #{tpu_custom_call.1} parent=1 // pred_fallthru
      _
    // Predicated region
    $region22: #{tpu_custom_call.1} parent=1 // pred_check
      _
    $region23: #{tpu_custom_call.1} parent=1 // pred_check_branch
      %34 = sbr.rel (0) target = $region25
    $region24: #{tpu_custom_call.1} parent=1 // pred_region
      %36 = dma.done [#allocation3], 512
    $region25: #{tpu_custom_call.1} parent=1 // pred_fallthru
      _
    %v37 = vld [vmem:[%s0] sm:$0xff]
    %v38 = vld [vmem:[%s0 + $0x8] sm:$0xff]
    %v39 = vld [vmem:[%s0 + $0x10] sm:$0xff]
    %v40 = vld [vmem:[%s0 + $0x18] sm:$0xff]
    %v41 = vld [vmem:[%s0 + $0x20] sm:$0xff]
    %v42 = vld [vmem:[%s0 + $0x28] sm:$0xff]
    %v43 = vld [vmem:[%s4] sm:$0xff]
    %v44 = vld [vmem:[%s4 + $0x8] sm:$0xff]
    %v45 = vld [vmem:[%s4 + $0x10] sm:$0xff]
    %v46 = vld [vmem:[%s4 + $0x18] sm:$0xff]
    %v47 = vld [vmem:[%s1] sm:$0xff]
    %v48 = vld [vmem:[%s1 + $0x8] sm:$0xff]
    %v49 = vld [vmem:[%s1 + $0x10] sm:$0xff]
    %v50 = vld [vmem:[%s1 + $0x18] sm:$0xff]
    %52 = vset.pattern.permute.xlu0 0
    %53 = vperm.xlu0 %52, %v43
    %v54 = vpop.permute.xlu0 %53
    %57 = vset.pattern.permute.xlu0 0
    %58 = vperm.xlu0 %57, %v44
    %v59 = vpop.permute.xlu0 %58
    %62 = vset.pattern.permute.xlu0 0
    %63 = vperm.xlu0 %62, %v45
    %v64 = vpop.permute.xlu0 %63
    %67 = vset.pattern.permute.xlu0 0
    %68 = vperm.xlu0 %67, %v46
    %v69 = vpop.permute.xlu0 %68
    %vm71 = vcmask 130048
    %v73 = vsel %vm71, %v47, 0
    %v76 = vsel %vm71, %v48, 0
    %v79 = vsel %vm71, %v49, 0
    %v82 = vsel %vm71, %v50, 0
    %84 = vmatpush.msra.mxu0 0.0
    %85 = vmatpush.msra.mxu0 0.0
    %86 = vmatpush.msra.mxu0 0.0
    %87 = vmatpush.msra.mxu0 0.0
    %88 = vmatpush.msra.mxu0 0.0
    %89 = vmatpush.msra.mxu0 0.0
    %90 = vmatpush.msra.mxu0 0.0
    %91 = vmatpush.msra.mxu0 0.0
    %92 = vmatpush.msra.mxu0 0.0
    %93 = vmatpush.msra.mxu0 0.0
    %94 = vmatpush.msra.mxu0 0.0
    %95 = vmatpush.msra.mxu0 0.0
    %96 = vmatpush.msra.mxu0 0.0
    %97 = vmatpush.msra.mxu0 0.0
    %98 = vmatpush.msra.mxu0 %v40
    %99 = vmatpush.msra.mxu0 %v37
    %100 = vmatmul.f32.gmra.mxu0 %v73
    %v101 = vpop.f32.mrf.mxu0
    %v102 = vadd.f32 %v54, %v101
    %103 = vmatmul.f32.gmra.mxu0 %v76
    %v104 = vpop.f32.mrf.mxu0
    %v105 = vadd.f32 %v59, %v104
    %106 = vmatmul.f32.gmra.mxu0 %v79
    %v107 = vpop.f32.mrf.mxu0
    %v108 = vadd.f32 %v64, %v107
    %109 = vmatmul.f32.gmra.mxu0 %v82
    %v110 = vpop.f32.mrf.mxu0
    %v111 = vadd.f32 %v69, %v110
    %112 = vdwg.mxu0
    %113 = vmatpush.msra.mxu0 0.0
    %114 = vmatpush.msra.mxu0 0.0
    %115 = vmatpush.msra.mxu0 0.0
    %116 = vmatpush.msra.mxu0 0.0
    %117 = vmatpush.msra.mxu0 0.0
    %118 = vmatpush.msra.mxu0 0.0
    %119 = vmatpush.msra.mxu0 0.0
    %120 = vmatpush.msra.mxu0 0.0
    %121 = vmatpush.msra.mxu0 0.0
    %122 = vmatpush.msra.mxu0 0.0
    %123 = vmatpush.msra.mxu0 0.0
    %124 = vmatpush.msra.mxu0 0.0
    %125 = vmatpush.msra.mxu0 0.0
    %126 = vmatpush.msra.mxu0 0.0
    %127 = vmatpush.msra.mxu0 %v41
    %128 = vmatpush.msra.mxu0 %v38
    %129 = vmatmul.f32.gmra.mxu0 %v73
    %v130 = vpop.f32.mrf.mxu0
    %v131 = vadd.f32 %v54, %v130
    %132 = vmatmul.f32.gmra.mxu0 %v76
    %v133 = vpop.f32.mrf.mxu0
    %v134 = vadd.f32 %v59, %v133
    %135 = vmatmul.f32.gmra.mxu0 %v79
    %v136 = vpop.f32.mrf.mxu0
    %v137 = vadd.f32 %v64, %v136
    %138 = vmatmul.f32.gmra.mxu0 %v82
    %v139 = vpop.f32.mrf.mxu0
    %v140 = vadd.f32 %v69, %v139
    %141 = vdwg.mxu0
    %142 = vmatpush.msra.mxu0 0.0
    %143 = vmatpush.msra.mxu0 0.0
    %144 = vmatpush.msra.mxu0 0.0
    %145 = vmatpush.msra.mxu0 0.0
    %146 = vmatpush.msra.mxu0 0.0
    %147 = vmatpush.msra.mxu0 0.0
    %148 = vmatpush.msra.mxu0 0.0
    %149 = vmatpush.msra.mxu0 0.0
    %150 = vmatpush.msra.mxu0 0.0
    %151 = vmatpush.msra.mxu0 0.0
    %152 = vmatpush.msra.mxu0 0.0
    %153 = vmatpush.msra.mxu0 0.0
    %154 = vmatpush.msra.mxu0 0.0
    %155 = vmatpush.msra.mxu0 0.0
    %156 = vmatpush.msra.mxu0 %v42
    %157 = vmatpush.msra.mxu0 %v39
    %158 = vmatmul.f32.gmra.mxu0 %v73
    %v159 = vpop.f32.mrf.mxu0
    %v160 = vadd.f32 %v54, %v159
    %161 = vmatmul.f32.gmra.mxu0 %v76
    %v162 = vpop.f32.mrf.mxu0
    %v163 = vadd.f32 %v59, %v162
    %164 = vmatmul.f32.gmra.mxu0 %v79
    %v165 = vpop.f32.mrf.mxu0
    %v166 = vadd.f32 %v64, %v165
    %167 = vmatmul.f32.gmra.mxu0 %v82
    %v168 = vpop.f32.mrf.mxu0
    %v169 = vadd.f32 %v69, %v168
    %170 = vdwg.mxu0
    %v171 = vmax.f32 %v102, 0.0
    %v172 = vmax.f32 %v131, 0.0
    %v173 = vmax.f32 %v160, 0.0
    %v174 = vmax.f32 %v105, 0.0
    %v175 = vmax.f32 %v134, 0.0
    %v176 = vmax.f32 %v163, 0.0
    %v177 = vmax.f32 %v108, 0.0
    %v178 = vmax.f32 %v137, 0.0
    %v179 = vmax.f32 %v166, 0.0
    %v180 = vmax.f32 %v111, 0.0
    %v181 = vmax.f32 %v140, 0.0
    %v182 = vmax.f32 %v169, 0.0
    %v183 = vld [vmem:[%s2] sm:$0xff]
    %v184 = vld [vmem:[%s2 + $0x8] sm:$0xff]
    %v185 = vld [vmem:[%s2 + $0x10] sm:$0xff]
    %v186 = vld [vmem:[%s2 + $0x18] sm:$0xff]
    %187 = vset.pattern.permute.xlu0 1
    %188 = vperm.xlu0 %187, %v43
    %v189 = vpop.permute.xlu0 %188
    %191 = vset.pattern.permute.xlu0 1
    %192 = vperm.xlu0 %191, %v44
    %v193 = vpop.permute.xlu0 %192
    %195 = vset.pattern.permute.xlu0 1
    %196 = vperm.xlu0 %195, %v45
    %v197 = vpop.permute.xlu0 %196
    %199 = vset.pattern.permute.xlu0 1
    %200 = vperm.xlu0 %199, %v46
    %v201 = vpop.permute.xlu0 %200
    %vm203 = vcmask 261120
    %v205 = vsel %vm203, %v183, 0
    %v208 = vsel %vm203, %v184, 0
    %v211 = vsel %vm203, %v185, 0
    %v214 = vsel %vm203, %v186, 0
    %216 = vmatpush.msra.mxu0 0.0
    %217 = vmatpush.msra.mxu0 0.0
    %218 = vmatpush.msra.mxu0 0.0
    %219 = vmatpush.msra.mxu0 0.0
    %220 = vmatpush.msra.mxu0 0.0
    %221 = vmatpush.msra.mxu0 0.0
    %222 = vmatpush.msra.mxu0 0.0
    %223 = vmatpush.msra.mxu0 0.0
    %224 = vmatpush.msra.mxu0 0.0
    %225 = vmatpush.msra.mxu0 0.0
    %226 = vmatpush.msra.mxu0 0.0
    %227 = vmatpush.msra.mxu0 0.0
    %228 = vmatpush.msra.mxu0 %v180
    %229 = vmatpush.msra.mxu0 %v177
    %230 = vmatpush.msra.mxu0 %v174
    %231 = vmatpush.msra.mxu0 %v171
    %232 = vmatmul.f32.gmra.mxu0 %v205
    %v233 = vpop.f32.mrf.mxu0
    %v234 = vadd.f32 %v189, %v233
    %235 = vmatmul.f32.gmra.mxu0 %v208
    %v236 = vpop.f32.mrf.mxu0
    %v237 = vadd.f32 %v193, %v236
    %238 = vmatmul.f32.gmra.mxu0 %v211
    %v239 = vpop.f32.mrf.mxu0
    %v240 = vadd.f32 %v197, %v239
    %241 = vmatmul.f32.gmra.mxu0 %v214
    %v242 = vpop.f32.mrf.mxu0
    %v243 = vadd.f32 %v201, %v242
    %244 = vdwg.mxu0
    %245 = vmatpush.msra.mxu0 0.0
    %246 = vmatpush.msra.mxu0 0.0
    %247 = vmatpush.msra.mxu0 0.0
    %248 = vmatpush.msra.mxu0 0.0
    %249 = vmatpush.msra.mxu0 0.0
    %250 = vmatpush.msra.mxu0 0.0
    %251 = vmatpush.msra.mxu0 0.0
    %252 = vmatpush.msra.mxu0 0.0
    %253 = vmatpush.msra.mxu0 0.0
    %254 = vmatpush.msra.mxu0 0.0
    %255 = vmatpush.msra.mxu0 0.0
    %256 = vmatpush.msra.mxu0 0.0
    %257 = vmatpush.msra.mxu0 %v181
    %258 = vmatpush.msra.mxu0 %v178
    %259 = vmatpush.msra.mxu0 %v175
    %260 = vmatpush.msra.mxu0 %v172
    %261 = vmatmul.f32.gmra.mxu0 %v205
    %v262 = vpop.f32.mrf.mxu0
    %v263 = vadd.f32 %v189, %v262
    %264 = vmatmul.f32.gmra.mxu0 %v208
    %v265 = vpop.f32.mrf.mxu0
    %v266 = vadd.f32 %v193, %v265
    %267 = vmatmul.f32.gmra.mxu0 %v211
    %v268 = vpop.f32.mrf.mxu0
    %v269 = vadd.f32 %v197, %v268
    %270 = vmatmul.f32.gmra.mxu0 %v214
    %v271 = vpop.f32.mrf.mxu0
    %v272 = vadd.f32 %v201, %v271
    %273 = vdwg.mxu0
    %274 = vmatpush.msra.mxu0 0.0
    %275 = vmatpush.msra.mxu0 0.0
    %276 = vmatpush.msra.mxu0 0.0
    %277 = vmatpush.msra.mxu0 0.0
    %278 = vmatpush.msra.mxu0 0.0
    %279 = vmatpush.msra.mxu0 0.0
    %280 = vmatpush.msra.mxu0 0.0
    %281 = vmatpush.msra.mxu0 0.0
    %282 = vmatpush.msra.mxu0 0.0
    %283 = vmatpush.msra.mxu0 0.0
    %284 = vmatpush.msra.mxu0 0.0
    %285 = vmatpush.msra.mxu0 0.0
    %286 = vmatpush.msra.mxu0 %v182
    %287 = vmatpush.msra.mxu0 %v179
    %288 = vmatpush.msra.mxu0 %v176
    %289 = vmatpush.msra.mxu0 %v173
    %290 = vmatmul.f32.gmra.mxu0 %v205
    %v291 = vpop.f32.mrf.mxu0
    %v292 = vadd.f32 %v189, %v291
    %293 = vmatmul.f32.gmra.mxu0 %v208
    %v294 = vpop.f32.mrf.mxu0
    %v295 = vadd.f32 %v193, %v294
    %296 = vmatmul.f32.gmra.mxu0 %v211
    %v297 = vpop.f32.mrf.mxu0
    %v298 = vadd.f32 %v197, %v297
    %299 = vmatmul.f32.gmra.mxu0 %v214
    %v300 = vpop.f32.mrf.mxu0
    %v301 = vadd.f32 %v201, %v300
    %302 = vdwg.mxu0
    %v303 = vmax.f32 %v234, 0.0
    %v304 = vmax.f32 %v263, 0.0
    %v305 = vmax.f32 %v292, 0.0
    %v306 = vmax.f32 %v237, 0.0
    %v307 = vmax.f32 %v266, 0.0
    %v308 = vmax.f32 %v295, 0.0
    %v309 = vmax.f32 %v240, 0.0
    %v310 = vmax.f32 %v269, 0.0
    %v311 = vmax.f32 %v298, 0.0
    %v312 = vmax.f32 %v243, 0.0
    %v313 = vmax.f32 %v272, 0.0
    %v314 = vmax.f32 %v301, 0.0
    %v315 = vld [vmem:[#allocation2] sm:$0xff]
    %v316 = vld [vmem:[#allocation2 + $0x8] sm:$0xff]
    %v317 = vld [vmem:[#allocation2 + $0x10] sm:$0xff]
    %v318 = vld [vmem:[#allocation2 + $0x18] sm:$0xff]
    %319 = vset.pattern.permute.xlu0 2
    %320 = vperm.xlu0 %319, %v43
    %v321 = vpop.permute.xlu0 %320
    %323 = vset.pattern.permute.xlu0 2
    %324 = vperm.xlu0 %323, %v44
    %v325 = vpop.permute.xlu0 %324
    %327 = vset.pattern.permute.xlu0 2
    %328 = vperm.xlu0 %327, %v45
    %v329 = vpop.permute.xlu0 %328
    %331 = vset.pattern.permute.xlu0 2
    %332 = vperm.xlu0 %331, %v46
    %v333 = vpop.permute.xlu0 %332
    %v336 = vsel %vm203, %v315, 0
    %v339 = vsel %vm203, %v316, 0
    %v342 = vsel %vm203, %v317, 0
    %v345 = vsel %vm203, %v318, 0
    %347 = vmatpush.msra.mxu0 0.0
    %348 = vmatpush.msra.mxu0 0.0
    %349 = vmatpush.msra.mxu0 0.0
    %350 = vmatpush.msra.mxu0 0.0
    %351 = vmatpush.msra.mxu0 0.0
    %352 = vmatpush.msra.mxu0 0.0
    %353 = vmatpush.msra.mxu0 0.0
    %354 = vmatpush.msra.mxu0 0.0
    %355 = vmatpush.msra.mxu0 0.0
    %356 = vmatpush.msra.mxu0 0.0
    %357 = vmatpush.msra.mxu0 0.0
    %358 = vmatpush.msra.mxu0 0.0
    %359 = vmatpush.msra.mxu0 %v312
    %360 = vmatpush.msra.mxu0 %v309
    %361 = vmatpush.msra.mxu0 %v306
    %362 = vmatpush.msra.mxu0 %v303
    %363 = vmatmul.f32.gmra.mxu0 %v336
    %v364 = vpop.f32.mrf.mxu0
    %v365 = vadd.f32 %v321, %v364
    %366 = vmatmul.f32.gmra.mxu0 %v339
    %v367 = vpop.f32.mrf.mxu0
    %v368 = vadd.f32 %v325, %v367
    %369 = vmatmul.f32.gmra.mxu0 %v342
    %v370 = vpop.f32.mrf.mxu0
    %v371 = vadd.f32 %v329, %v370
    %372 = vmatmul.f32.gmra.mxu0 %v345
    %v373 = vpop.f32.mrf.mxu0
    %v374 = vadd.f32 %v333, %v373
    %375 = vdwg.mxu0
    %376 = vmatpush.msra.mxu0 0.0
    %377 = vmatpush.msra.mxu0 0.0
    %378 = vmatpush.msra.mxu0 0.0
    %379 = vmatpush.msra.mxu0 0.0
    %380 = vmatpush.msra.mxu0 0.0
    %381 = vmatpush.msra.mxu0 0.0
    %382 = vmatpush.msra.mxu0 0.0
    %383 = vmatpush.msra.mxu0 0.0
    %384 = vmatpush.msra.mxu0 0.0
    %385 = vmatpush.msra.mxu0 0.0
    %386 = vmatpush.msra.mxu0 0.0
    %387 = vmatpush.msra.mxu0 0.0
    %388 = vmatpush.msra.mxu0 %v313
    %389 = vmatpush.msra.mxu0 %v310
    %390 = vmatpush.msra.mxu0 %v307
    %391 = vmatpush.msra.mxu0 %v304
    %392 = vmatmul.f32.gmra.mxu0 %v336
    %v393 = vpop.f32.mrf.mxu0
    %v394 = vadd.f32 %v321, %v393
    %395 = vmatmul.f32.gmra.mxu0 %v339
    %v396 = vpop.f32.mrf.mxu0
    %v397 = vadd.f32 %v325, %v396
    %398 = vmatmul.f32.gmra.mxu0 %v342
    %v399 = vpop.f32.mrf.mxu0
    %v400 = vadd.f32 %v329, %v399
    %401 = vmatmul.f32.gmra.mxu0 %v345
    %v402 = vpop.f32.mrf.mxu0
    %v403 = vadd.f32 %v333, %v402
    %404 = vdwg.mxu0
    %405 = vmatpush.msra.mxu0 0.0
    %406 = vmatpush.msra.mxu0 0.0
    %407 = vmatpush.msra.mxu0 0.0
    %408 = vmatpush.msra.mxu0 0.0
    %409 = vmatpush.msra.mxu0 0.0
    %410 = vmatpush.msra.mxu0 0.0
    %411 = vmatpush.msra.mxu0 0.0
    %412 = vmatpush.msra.mxu0 0.0
    %413 = vmatpush.msra.mxu0 0.0
    %414 = vmatpush.msra.mxu0 0.0
    %415 = vmatpush.msra.mxu0 0.0
    %416 = vmatpush.msra.mxu0 0.0
    %417 = vmatpush.msra.mxu0 %v314
    %418 = vmatpush.msra.mxu0 %v311
    %419 = vmatpush.msra.mxu0 %v308
    %420 = vmatpush.msra.mxu0 %v305
    %421 = vmatmul.f32.gmra.mxu0 %v336
    %v422 = vpop.f32.mrf.mxu0
    %v423 = vadd.f32 %v321, %v422
    %424 = vmatmul.f32.gmra.mxu0 %v339
    %v425 = vpop.f32.mrf.mxu0
    %v426 = vadd.f32 %v325, %v425
    %427 = vmatmul.f32.gmra.mxu0 %v342
    %v428 = vpop.f32.mrf.mxu0
    %v429 = vadd.f32 %v329, %v428
    %430 = vmatmul.f32.gmra.mxu0 %v345
    %v431 = vpop.f32.mrf.mxu0
    %v432 = vadd.f32 %v333, %v431
    %433 = vdwg.mxu0
    %v434 = vmax.f32 %v365, 0.0
    %v435 = vmax.f32 %v394, 0.0
    %v436 = vmax.f32 %v423, 0.0
    %v437 = vmax.f32 %v368, 0.0
    %v438 = vmax.f32 %v397, 0.0
    %v439 = vmax.f32 %v426, 0.0
    %v440 = vmax.f32 %v371, 0.0
    %v441 = vmax.f32 %v400, 0.0
    %v442 = vmax.f32 %v429, 0.0
    %v443 = vmax.f32 %v374, 0.0
    %v444 = vmax.f32 %v403, 0.0
    %v445 = vmax.f32 %v432, 0.0
    %446 = vset.pattern.permute.xlu0 3
    %447 = vperm.xlu0 %446, %v43
    %v448 = vpop.permute.xlu0 %447
    %450 = vset.pattern.permute.xlu0 3
    %451 = vperm.xlu0 %450, %v44
    %v452 = vpop.permute.xlu0 %451
    %454 = vset.pattern.permute.xlu0 3
    %455 = vperm.xlu0 %454, %v45
    %v456 = vpop.permute.xlu0 %455
    %458 = vset.pattern.permute.xlu0 3
    %459 = vperm.xlu0 %458, %v46
    %v460 = vpop.permute.xlu0 %459
    %v462 = vmul.f32 %v434, %v448
    %v463 = vmul.f32 %v435, %v448
    %v464 = vmul.f32 %v436, %v448
    %v465 = vmul.f32 %v437, %v452
    %v466 = vmul.f32 %v438, %v452
    %v467 = vmul.f32 %v439, %v452
    %v468 = vmul.f32 %v440, %v456
    %v469 = vmul.f32 %v441, %v456
    %v470 = vmul.f32 %v442, %v456
    %v471 = vmul.f32 %v443, %v460
    %v472 = vmul.f32 %v444, %v460
    %v473 = vmul.f32 %v445, %v460
    %v474 = vadd.f32 %v462, %v465
    %v475 = vadd.f32 %v474, %v468
    %v476 = vadd.f32 %v475, %v471
    %v477 = vrot.slane %v476, 4
    %v478 = vadd.f32 %v476, %v477
    %v479 = vrot.slane %v478, 2
    %v480 = vadd.f32 %v478, %v479
    %v481 = vrot.slane %v480, 1
    %v482 = vadd.f32 %v480, %v481
    %v483 = vadd.f32 %v463, %v466
    %v484 = vadd.f32 %v483, %v469
    %v485 = vadd.f32 %v484, %v472
    %v486 = vrot.slane %v485, 4
    %v487 = vadd.f32 %v485, %v486
    %v488 = vrot.slane %v487, 2
    %v489 = vadd.f32 %v487, %v488
    %v490 = vrot.slane %v489, 1
    %v491 = vadd.f32 %v489, %v490
    %v492 = vadd.f32 %v464, %v467
    %v493 = vadd.f32 %v492, %v470
    %v494 = vadd.f32 %v493, %v473
    %v495 = vrot.slane %v494, 4
    %v496 = vadd.f32 %v494, %v495
    %v497 = vrot.slane %v496, 2
    %v498 = vadd.f32 %v496, %v497
    %v499 = vrot.slane %v498, 1
    %v500 = vadd.f32 %v498, %v499
    %501 = vset.pattern.permute.xlu0 4
    %502 = vperm.xlu0 %501, %v43
    %v503 = vpop.permute.xlu0 %502
    %v505 = vadd.f32 %v482, %v503
    %v506 = vadd.f32 %v491, %v503
    %v507 = vadd.f32 %v500, %v503
    %v508 = vxor.u32 %v505, 2147483648
    %v509 = vxor.u32 %v506, 2147483648
    %v510 = vxor.u32 %v507, 2147483648
    %v511 = vmul.f32 %v508, 1.442695
    %v512 = vpow.pop %v511
    %v513 = vmul.f32 %v509, 1.442695
    %v514 = vpow.pop %v513
    %v515 = vmul.f32 %v510, 1.442695
    %v516 = vpow.pop %v515
    %v517 = vadd.f32 %v512, 1.0
    %v518 = vadd.f32 %v514, 1.0
    %v519 = vadd.f32 %v516, 1.0
    %v520 = vrcp.pop %v517
    %v521 = vmul.f32 %v517, %v520
    %v522 = vsub.f32 1.0, %v521
    %v523 = vmul.f32 %v520, %v522
    %v524 = vadd.f32 %v520, %v523
    %vm525 = vweird.f32 %v517
    %vm526 = vweird.f32 %v520
    %vm527 = vmor %vm525, %vm526
    %v528 = vsel %vm527, %v520, %v524
    %v529 = vand.u32 2147483647, %v517
    %vm530 = vcmp.eq.f32.partialorder %v529, 8.507059e+37
    %v531 = vand.u32 %v517, 2147483648
    %v532 = vor.u32 1.1754944e-38, %v531
    %v533 = vsel %vm530, %v532, %v528
    %v534 = vmul.f32 1.0, %v533
    %v535 = vrcp.pop %v518
    %v536 = vmul.f32 %v518, %v535
    %v537 = vsub.f32 1.0, %v536
    %v538 = vmul.f32 %v535, %v537
    %v539 = vadd.f32 %v535, %v538
    %vm540 = vweird.f32 %v518
    %vm541 = vweird.f32 %v535
    %vm542 = vmor %vm540, %vm541
    %v543 = vsel %vm542, %v535, %v539
    %v544 = vand.u32 2147483647, %v518
    %vm545 = vcmp.eq.f32.partialorder %v544, 8.507059e+37
    %v546 = vand.u32 %v518, 2147483648
    %v547 = vor.u32 1.1754944e-38, %v546
    %v548 = vsel %vm545, %v547, %v543
    %v549 = vmul.f32 1.0, %v548
    %v550 = vrcp.pop %v519
    %v551 = vmul.f32 %v519, %v550
    %v552 = vsub.f32 1.0, %v551
    %v553 = vmul.f32 %v550, %v552
    %v554 = vadd.f32 %v550, %v553
    %vm555 = vweird.f32 %v519
    %vm556 = vweird.f32 %v550
    %vm557 = vmor %vm555, %vm556
    %v558 = vsel %vm557, %v550, %v554
    %v559 = vand.u32 2147483647, %v519
    %vm560 = vcmp.eq.f32.partialorder %v559, 8.507059e+37
    %v561 = vand.u32 %v519, 2147483648
    %v562 = vor.u32 1.1754944e-38, %v561
    %v563 = vsel %vm560, %v562, %v558
    %v564 = vmul.f32 1.0, %v563
    %v568 = vrot.slane %v549, 7
    %v569 = vrot.slane %v564, 6
    %vm570 = vcmask 1040384
    %v571 = vsel %vm570, %v534, %v568
    %vm572 = vcmask 1041408
    %v573 = vsel %vm572, %v571, %v569
    %v575 = vlaneseq
    %vm576 = vcmp.ge.s32.totalorder %v575, 0
    %vm577 = vcmp.lt.s32.totalorder %v575, 384
    %vm578 = vmand %vm576, %vm577
    %579 = vst.msk [vmem:[#allocation5] sm:$0x7] %vm578, %v573
    // Predicated region
    $region26: #{tpu_custom_call.1} parent=1 // pred_check
      _
    $region27: #{tpu_custom_call.1} parent=1 // pred_check_branch
      %581 = sbr.rel (0) target = $region29
    $region28: #{tpu_custom_call.1} parent=1 // pred_region
      %583 = vsyncadd [#allocation4], 0
      %s585 = sshll.u32 [#allocation5], 4
      %s586 = int_to_ptr.vmem [resolvable:$true] %s585
      %s587 = sshll.u32 %s5, 4
      %s588 = int_to_ptr.hbm [resolvable:$true] %s587
      %590 = dma.vmem_to_hbm [thread:$0]  %s586, 48, %s588, [#allocation4]
    $region29: #{tpu_custom_call.1} parent=1 // pred_fallthru
      _
    // Predicated region
    $region30: #{tpu_custom_call.1} parent=1 // pred_check
      _
    $region31: #{tpu_custom_call.1} parent=1 // pred_check_branch
      %592 = sbr.rel (0) target = $region33
    $region32: #{tpu_custom_call.1} parent=1 // pred_region
      %594 = dma.done [#allocation4], 48
    $region33: #{tpu_custom_call.1} parent=1 // pred_fallthru
      _
    %595 = vsyncpa [#allocation3], 1
    %596 = vsyncpa [#allocation4], 1

// kernel: tpu_custom_call.1
$region0: #{tpu_custom_call.1}
  #allocation0 [shape = 'u32[]', space=smem, size = 0x4, offset = 0x4, fixed_abs, tag = 'smem constant byte address 0x4 - core index']
  #allocation1 [shape = 'u32[72,128]{1,0:T(1,128)}', space=vmem, size = 0x9000, scoped, tag = 'internal scratch']
  %s0 = inlined_call_operand.vmem [shape: f32[16,384], index: 0, kind: input, shape index: {}]
  %s1 = inlined_call_operand.vmem [shape: f32[32,16], index: 1, kind: input, shape index: {}]
  %s2 = inlined_call_operand.vmem [shape: f32[32,32], index: 2, kind: input, shape index: {}]
  %s3 = inlined_call_operand.hbm [shape: f32[32,32], index: 3, kind: input, shape index: {}]
  %s4 = inlined_call_operand.vmem [shape: f32[32,5], index: 4, kind: input, shape index: {}]
  %s5 = inlined_call_operand.hbm [shape: f32[1,384], index: 5, kind: output, shape index: {}]
  %s6 = sld [smem:[#allocation0]]
  $region34: #{tpu_custom_call.1} parent=0
    _
  %s8 = ssub.s32 1, %s6
  %s9 = scalar_select 0, %s8, %s6
  $region1: #{tpu_custom_call.1} parent=0
    #allocation2 [shape = 'u8[16384]{0}', space=vmem, size = 0x4000, scoped, tag = 'input window, operand 3, single buffered']
    #allocation3 [shape = 's32[1]{0}', space=sflag, size = 0x4, scoped, tag = 'scoped memory for tpu_custom_call.1']
    #allocation4 [shape = 's32[1]{0}', space=sflag, size = 0x4, scoped, tag = 'scoped memory for tpu_custom_call.1']
    #allocation5 [shape = 'u8[1536]{0}', space=vmem, size = 0x800, scoped, tag = 'output window, operand 0, single buffered']
    %10 = vsyncpa [#allocation3], 0
    %11 = vsyncpa [#allocation4], 0
    // Predicated region
    $region2: #{tpu_custom_call.1} parent=1 // pred_check
      _
    $region3: #{tpu_custom_call.1} parent=1 // pred_check_branch
      %13 = sbr.rel (0) target = $region5
    $region4: #{tpu_custom_call.1} parent=1 // pred_region
      _
    $region5: #{tpu_custom_call.1} parent=1 // pred_fallthru
      _
    // Predicated region
    $region6: #{tpu_custom_call.1} parent=1 // pred_check
      _
    $region7: #{tpu_custom_call.1} parent=1 // pred_check_branch
      %15 = sbr.rel (0) target = $region9
    $region8: #{tpu_custom_call.1} parent=1 // pred_region
      _
    $region9: #{tpu_custom_call.1} parent=1 // pred_fallthru
      _
    // Predicated region
    $region10: #{tpu_custom_call.1} parent=1 // pred_check
      _
    $region11: #{tpu_custom_call.1} parent=1 // pred_check_branch
      %17 = sbr.rel (0) target = $region13
    $region12: #{tpu_custom_call.1} parent=1 // pred_region
      _
    $region13: #{tpu_custom_call.1} parent=1 // pred_fallthru
      _
    // Predicated region
    $region14: #{tpu_custom_call.1} parent=1 // pred_check
      _
    $region15: #{tpu_custom_call.1} parent=1 // pred_check_branch
      %19 = sbr.rel (0) target = $region17
    $region16: #{tpu_custom_call.1} parent=1 // pred_region
      %21 = vsyncadd [#allocation3], 0
      %s22 = sshll.u32 %s3, 4
      %s23 = int_to_ptr.hbm [resolvable:$true] %s22
      %s24 = sshll.u32 [#allocation2], 4
      %s25 = int_to_ptr.vmem [resolvable:$true] %s24
      %30 = dma.hbm_to_vmem [thread:$0]  %s23, 512, %s25, [#allocation3], 128, 128, 8
    $region17: #{tpu_custom_call.1} parent=1 // pred_fallthru
      _
    // Predicated region
    $region18: #{tpu_custom_call.1} parent=1 // pred_check
      _
    $region19: #{tpu_custom_call.1} parent=1 // pred_check_branch
      %32 = sbr.rel (0) target = $region21
    $region20: #{tpu_custom_call.1} parent=1 // pred_region
      _
    $region21: #{tpu_custom_call.1} parent=1 // pred_fallthru
      _
    // Predicated region
    $region22: #{tpu_custom_call.1} parent=1 // pred_check
      _
    $region23: #{tpu_custom_call.1} parent=1 // pred_check_branch
      %34 = sbr.rel (0) target = $region25
    $region24: #{tpu_custom_call.1} parent=1 // pred_region
      %36 = dma.done [#allocation3], 512
    $region25: #{tpu_custom_call.1} parent=1 // pred_fallthru
      _
    %v37 = vld [vmem:[%s0] sm:$0xff]
    %v38 = vld [vmem:[%s0 + $0x8] sm:$0xff]
    %v39 = vld [vmem:[%s0 + $0x10] sm:$0xff]
    %v40 = vld [vmem:[%s0 + $0x18] sm:$0xff]
    %v41 = vld [vmem:[%s0 + $0x20] sm:$0xff]
    %v42 = vld [vmem:[%s0 + $0x28] sm:$0xff]
    %v43 = vld [vmem:[%s4] sm:$0xff]
    %v44 = vld [vmem:[%s4 + $0x8] sm:$0xff]
    %v45 = vld [vmem:[%s4 + $0x10] sm:$0xff]
    %v46 = vld [vmem:[%s4 + $0x18] sm:$0xff]
    %v47 = vld [vmem:[%s1] sm:$0xff]
    %v48 = vld [vmem:[%s1 + $0x8] sm:$0xff]
    %v49 = vld [vmem:[%s1 + $0x10] sm:$0xff]
    %v50 = vld [vmem:[%s1 + $0x18] sm:$0xff]
    %52 = vset.pattern.permute.xlu0 0
    %53 = vperm.xlu0 %52, %v43
    %v54 = vpop.permute.xlu0 %53
    %57 = vset.pattern.permute.xlu0 0
    %58 = vperm.xlu0 %57, %v44
    %v59 = vpop.permute.xlu0 %58
    %62 = vset.pattern.permute.xlu0 0
    %63 = vperm.xlu0 %62, %v45
    %v64 = vpop.permute.xlu0 %63
    %67 = vset.pattern.permute.xlu0 0
    %68 = vperm.xlu0 %67, %v46
    %v69 = vpop.permute.xlu0 %68
    %vm71 = vcmask 130048
    %v73 = vsel %vm71, %v47, 0
    %v76 = vsel %vm71, %v48, 0
    %v79 = vsel %vm71, %v49, 0
    %v82 = vsel %vm71, %v50, 0
    %84 = vmatpush.msra.mxu0 0.0
    %85 = vmatpush.msra.mxu0 0.0
    %86 = vmatpush.msra.mxu0 0.0
    %87 = vmatpush.msra.mxu0 0.0
    %88 = vmatpush.msra.mxu0 0.0
    %89 = vmatpush.msra.mxu0 0.0
    %90 = vmatpush.msra.mxu0 0.0
    %91 = vmatpush.msra.mxu0 0.0
    %92 = vmatpush.msra.mxu0 0.0
    %93 = vmatpush.msra.mxu0 0.0
    %94 = vmatpush.msra.mxu0 0.0
    %95 = vmatpush.msra.mxu0 0.0
    %96 = vmatpush.msra.mxu0 0.0
    %97 = vmatpush.msra.mxu0 0.0
    %98 = vmatpush.msra.mxu0 %v40
    %99 = vmatpush.msra.mxu0 %v37
    %100 = vmatmul.f32.gmra.mxu0 %v73
    %v101 = vpop.f32.mrf.mxu0
    %v102 = vadd.f32 %v54, %v101
    %103 = vmatmul.f32.gmra.mxu0 %v76
    %v104 = vpop.f32.mrf.mxu0
    %v105 = vadd.f32 %v59, %v104
    %106 = vmatmul.f32.gmra.mxu0 %v79
    %v107 = vpop.f32.mrf.mxu0
    %v108 = vadd.f32 %v64, %v107
    %109 = vmatmul.f32.gmra.mxu0 %v82
    %v110 = vpop.f32.mrf.mxu0
    %v111 = vadd.f32 %v69, %v110
    %112 = vdwg.mxu0
    %113 = vmatpush.msra.mxu0 0.0
    %114 = vmatpush.msra.mxu0 0.0
    %115 = vmatpush.msra.mxu0 0.0
    %116 = vmatpush.msra.mxu0 0.0
    %117 = vmatpush.msra.mxu0 0.0
    %118 = vmatpush.msra.mxu0 0.0
    %119 = vmatpush.msra.mxu0 0.0
    %120 = vmatpush.msra.mxu0 0.0
    %121 = vmatpush.msra.mxu0 0.0
    %122 = vmatpush.msra.mxu0 0.0
    %123 = vmatpush.msra.mxu0 0.0
    %124 = vmatpush.msra.mxu0 0.0
    %125 = vmatpush.msra.mxu0 0.0
    %126 = vmatpush.msra.mxu0 0.0
    %127 = vmatpush.msra.mxu0 %v41
    %128 = vmatpush.msra.mxu0 %v38
    %129 = vmatmul.f32.gmra.mxu0 %v73
    %v130 = vpop.f32.mrf.mxu0
    %v131 = vadd.f32 %v54, %v130
    %132 = vmatmul.f32.gmra.mxu0 %v76
    %v133 = vpop.f32.mrf.mxu0
    %v134 = vadd.f32 %v59, %v133
    %135 = vmatmul.f32.gmra.mxu0 %v79
    %v136 = vpop.f32.mrf.mxu0
    %v137 = vadd.f32 %v64, %v136
    %138 = vmatmul.f32.gmra.mxu0 %v82
    %v139 = vpop.f32.mrf.mxu0
    %v140 = vadd.f32 %v69, %v139
    %141 = vdwg.mxu0
    %142 = vmatpush.msra.mxu0 0.0
    %143 = vmatpush.msra.mxu0 0.0
    %144 = vmatpush.msra.mxu0 0.0
    %145 = vmatpush.msra.mxu0 0.0
    %146 = vmatpush.msra.mxu0 0.0
    %147 = vmatpush.msra.mxu0 0.0
    %148 = vmatpush.msra.mxu0 0.0
    %149 = vmatpush.msra.mxu0 0.0
    %150 = vmatpush.msra.mxu0 0.0
    %151 = vmatpush.msra.mxu0 0.0
    %152 = vmatpush.msra.mxu0 0.0
    %153 = vmatpush.msra.mxu0 0.0
    %154 = vmatpush.msra.mxu0 0.0
    %155 = vmatpush.msra.mxu0 0.0
    %156 = vmatpush.msra.mxu0 %v42
    %157 = vmatpush.msra.mxu0 %v39
    %158 = vmatmul.f32.gmra.mxu0 %v73
    %v159 = vpop.f32.mrf.mxu0
    %v160 = vadd.f32 %v54, %v159
    %161 = vmatmul.f32.gmra.mxu0 %v76
    %v162 = vpop.f32.mrf.mxu0
    %v163 = vadd.f32 %v59, %v162
    %164 = vmatmul.f32.gmra.mxu0 %v79
    %v165 = vpop.f32.mrf.mxu0
    %v166 = vadd.f32 %v64, %v165
    %167 = vmatmul.f32.gmra.mxu0 %v82
    %v168 = vpop.f32.mrf.mxu0
    %v169 = vadd.f32 %v69, %v168
    %170 = vdwg.mxu0
    %v171 = vmax.f32 %v102, 0.0
    %v172 = vmax.f32 %v131, 0.0
    %v173 = vmax.f32 %v160, 0.0
    %v174 = vmax.f32 %v105, 0.0
    %v175 = vmax.f32 %v134, 0.0
    %v176 = vmax.f32 %v163, 0.0
    %v177 = vmax.f32 %v108, 0.0
    %v178 = vmax.f32 %v137, 0.0
    %v179 = vmax.f32 %v166, 0.0
    %v180 = vmax.f32 %v111, 0.0
    %v181 = vmax.f32 %v140, 0.0
    %v182 = vmax.f32 %v169, 0.0
    %v183 = vld [vmem:[%s2] sm:$0xff]
    %v184 = vld [vmem:[%s2 + $0x8] sm:$0xff]
    %v185 = vld [vmem:[%s2 + $0x10] sm:$0xff]
    %v186 = vld [vmem:[%s2 + $0x18] sm:$0xff]
    %187 = vset.pattern.permute.xlu0 1
    %188 = vperm.xlu0 %187, %v43
    %v189 = vpop.permute.xlu0 %188
    %191 = vset.pattern.permute.xlu0 1
    %192 = vperm.xlu0 %191, %v44
    %v193 = vpop.permute.xlu0 %192
    %195 = vset.pattern.permute.xlu0 1
    %196 = vperm.xlu0 %195, %v45
    %v197 = vpop.permute.xlu0 %196
    %199 = vset.pattern.permute.xlu0 1
    %200 = vperm.xlu0 %199, %v46
    %v201 = vpop.permute.xlu0 %200
    %vm203 = vcmask 261120
    %v205 = vsel %vm203, %v183, 0
    %v208 = vsel %vm203, %v184, 0
    %v211 = vsel %vm203, %v185, 0
    %v214 = vsel %vm203, %v186, 0
    %216 = vmatpush.msra.mxu0 0.0
    %217 = vmatpush.msra.mxu0 0.0
    %218 = vmatpush.msra.mxu0 0.0
    %219 = vmatpush.msra.mxu0 0.0
    %220 = vmatpush.msra.mxu0 0.0
    %221 = vmatpush.msra.mxu0 0.0
    %222 = vmatpush.msra.mxu0 0.0
    %223 = vmatpush.msra.mxu0 0.0
    %224 = vmatpush.msra.mxu0 0.0
    %225 = vmatpush.msra.mxu0 0.0
    %226 = vmatpush.msra.mxu0 0.0
    %227 = vmatpush.msra.mxu0 0.0
    %228 = vmatpush.msra.mxu0 %v180
    %229 = vmatpush.msra.mxu0 %v177
    %230 = vmatpush.msra.mxu0 %v174
    %231 = vmatpush.msra.mxu0 %v171
    %232 = vmatmul.f32.gmra.mxu0 %v205
    %v233 = vpop.f32.mrf.mxu0
    %v234 = vadd.f32 %v189, %v233
    %235 = vmatmul.f32.gmra.mxu0 %v208
    %v236 = vpop.f32.mrf.mxu0
    %v237 = vadd.f32 %v193, %v236
    %238 = vmatmul.f32.gmra.mxu0 %v211
    %v239 = vpop.f32.mrf.mxu0
    %v240 = vadd.f32 %v197, %v239
    %241 = vmatmul.f32.gmra.mxu0 %v214
    %v242 = vpop.f32.mrf.mxu0
    %v243 = vadd.f32 %v201, %v242
    %244 = vdwg.mxu0
    %245 = vmatpush.msra.mxu0 0.0
    %246 = vmatpush.msra.mxu0 0.0
    %247 = vmatpush.msra.mxu0 0.0
    %248 = vmatpush.msra.mxu0 0.0
    %249 = vmatpush.msra.mxu0 0.0
    %250 = vmatpush.msra.mxu0 0.0
    %251 = vmatpush.msra.mxu0 0.0
    %252 = vmatpush.msra.mxu0 0.0
    %253 = vmatpush.msra.mxu0 0.0
    %254 = vmatpush.msra.mxu0 0.0
    %255 = vmatpush.msra.mxu0 0.0
    %256 = vmatpush.msra.mxu0 0.0
    %257 = vmatpush.msra.mxu0 %v181
    %258 = vmatpush.msra.mxu0 %v178
    %259 = vmatpush.msra.mxu0 %v175
    %260 = vmatpush.msra.mxu0 %v172
    %261 = vmatmul.f32.gmra.mxu0 %v205
    %v262 = vpop.f32.mrf.mxu0
    %v263 = vadd.f32 %v189, %v262
    %264 = vmatmul.f32.gmra.mxu0 %v208
    %v265 = vpop.f32.mrf.mxu0
    %v266 = vadd.f32 %v193, %v265
    %267 = vmatmul.f32.gmra.mxu0 %v211
    %v268 = vpop.f32.mrf.mxu0
    %v269 = vadd.f32 %v197, %v268
    %270 = vmatmul.f32.gmra.mxu0 %v214
    %v271 = vpop.f32.mrf.mxu0
    %v272 = vadd.f32 %v201, %v271
    %273 = vdwg.mxu0
    %274 = vmatpush.msra.mxu0 0.0
    %275 = vmatpush.msra.mxu0 0.0
    %276 = vmatpush.msra.mxu0 0.0
    %277 = vmatpush.msra.mxu0 0.0
    %278 = vmatpush.msra.mxu0 0.0
    %279 = vmatpush.msra.mxu0 0.0
    %280 = vmatpush.msra.mxu0 0.0
    %281 = vmatpush.msra.mxu0 0.0
    %282 = vmatpush.msra.mxu0 0.0
    %283 = vmatpush.msra.mxu0 0.0
    %284 = vmatpush.msra.mxu0 0.0
    %285 = vmatpush.msra.mxu0 0.0
    %286 = vmatpush.msra.mxu0 %v182
    %287 = vmatpush.msra.mxu0 %v179
    %288 = vmatpush.msra.mxu0 %v176
    %289 = vmatpush.msra.mxu0 %v173
    %290 = vmatmul.f32.gmra.mxu0 %v205
    %v291 = vpop.f32.mrf.mxu0
    %v292 = vadd.f32 %v189, %v291
    %293 = vmatmul.f32.gmra.mxu0 %v208
    %v294 = vpop.f32.mrf.mxu0
    %v295 = vadd.f32 %v193, %v294
    %296 = vmatmul.f32.gmra.mxu0 %v211
    %v297 = vpop.f32.mrf.mxu0
    %v298 = vadd.f32 %v197, %v297
    %299 = vmatmul.f32.gmra.mxu0 %v214
    %v300 = vpop.f32.mrf.mxu0
    %v301 = vadd.f32 %v201, %v300
    %302 = vdwg.mxu0
    %v303 = vmax.f32 %v234, 0.0
    %v304 = vmax.f32 %v263, 0.0
    %v305 = vmax.f32 %v292, 0.0
    %v306 = vmax.f32 %v237, 0.0
    %v307 = vmax.f32 %v266, 0.0
    %v308 = vmax.f32 %v295, 0.0
    %v309 = vmax.f32 %v240, 0.0
    %v310 = vmax.f32 %v269, 0.0
    %v311 = vmax.f32 %v298, 0.0
    %v312 = vmax.f32 %v243, 0.0
    %v313 = vmax.f32 %v272, 0.0
    %v314 = vmax.f32 %v301, 0.0
    %v315 = vld [vmem:[#allocation2] sm:$0xff]
    %v316 = vld [vmem:[#allocation2 + $0x8] sm:$0xff]
    %v317 = vld [vmem:[#allocation2 + $0x10] sm:$0xff]
    %v318 = vld [vmem:[#allocation2 + $0x18] sm:$0xff]
    %319 = vset.pattern.permute.xlu0 2
    %320 = vperm.xlu0 %319, %v43
    %v321 = vpop.permute.xlu0 %320
    %323 = vset.pattern.permute.xlu0 2
    %324 = vperm.xlu0 %323, %v44
    %v325 = vpop.permute.xlu0 %324
    %327 = vset.pattern.permute.xlu0 2
    %328 = vperm.xlu0 %327, %v45
    %v329 = vpop.permute.xlu0 %328
    %331 = vset.pattern.permute.xlu0 2
    %332 = vperm.xlu0 %331, %v46
    %v333 = vpop.permute.xlu0 %332
    %v336 = vsel %vm203, %v315, 0
    %v339 = vsel %vm203, %v316, 0
    %v342 = vsel %vm203, %v317, 0
    %v345 = vsel %vm203, %v318, 0
    %347 = vmatpush.msra.mxu0 0.0
    %348 = vmatpush.msra.mxu0 0.0
    %349 = vmatpush.msra.mxu0 0.0
    %350 = vmatpush.msra.mxu0 0.0
    %351 = vmatpush.msra.mxu0 0.0
    %352 = vmatpush.msra.mxu0 0.0
    %353 = vmatpush.msra.mxu0 0.0
    %354 = vmatpush.msra.mxu0 0.0
    %355 = vmatpush.msra.mxu0 0.0
    %356 = vmatpush.msra.mxu0 0.0
    %357 = vmatpush.msra.mxu0 0.0
    %358 = vmatpush.msra.mxu0 0.0
    %359 = vmatpush.msra.mxu0 %v312
    %360 = vmatpush.msra.mxu0 %v309
    %361 = vmatpush.msra.mxu0 %v306
    %362 = vmatpush.msra.mxu0 %v303
    %363 = vmatmul.f32.gmra.mxu0 %v336
    %v364 = vpop.f32.mrf.mxu0
    %v365 = vadd.f32 %v321, %v364
    %366 = vmatmul.f32.gmra.mxu0 %v339
    %v367 = vpop.f32.mrf.mxu0
    %v368 = vadd.f32 %v325, %v367
    %369 = vmatmul.f32.gmra.mxu0 %v342
    %v370 = vpop.f32.mrf.mxu0
    %v371 = vadd.f32 %v329, %v370
    %372 = vmatmul.f32.gmra.mxu0 %v345
    %v373 = vpop.f32.mrf.mxu0
    %v374 = vadd.f32 %v333, %v373
    %375 = vdwg.mxu0
    %376 = vmatpush.msra.mxu0 0.0
    %377 = vmatpush.msra.mxu0 0.0
    %378 = vmatpush.msra.mxu0 0.0
    %379 = vmatpush.msra.mxu0 0.0
    %380 = vmatpush.msra.mxu0 0.0
    %381 = vmatpush.msra.mxu0 0.0
    %382 = vmatpush.msra.mxu0 0.0
    %383 = vmatpush.msra.mxu0 0.0
    %384 = vmatpush.msra.mxu0 0.0
    %385 = vmatpush.msra.mxu0 0.0
    %386 = vmatpush.msra.mxu0 0.0
    %387 = vmatpush.msra.mxu0 0.0
    %388 = vmatpush.msra.mxu0 %v313
    %389 = vmatpush.msra.mxu0 %v310
    %390 = vmatpush.msra.mxu0 %v307
    %391 = vmatpush.msra.mxu0 %v304
    %392 = vmatmul.f32.gmra.mxu0 %v336
    %v393 = vpop.f32.mrf.mxu0
    %v394 = vadd.f32 %v321, %v393
    %395 = vmatmul.f32.gmra.mxu0 %v339
    %v396 = vpop.f32.mrf.mxu0
    %v397 = vadd.f32 %v325, %v396
    %398 = vmatmul.f32.gmra.mxu0 %v342
    %v399 = vpop.f32.mrf.mxu0
    %v400 = vadd.f32 %v329, %v399
    %401 = vmatmul.f32.gmra.mxu0 %v345
    %v402 = vpop.f32.mrf.mxu0
    %v403 = vadd.f32 %v333, %v402
    %404 = vdwg.mxu0
    %405 = vmatpush.msra.mxu0 0.0
    %406 = vmatpush.msra.mxu0 0.0
    %407 = vmatpush.msra.mxu0 0.0
    %408 = vmatpush.msra.mxu0 0.0
    %409 = vmatpush.msra.mxu0 0.0
    %410 = vmatpush.msra.mxu0 0.0
    %411 = vmatpush.msra.mxu0 0.0
    %412 = vmatpush.msra.mxu0 0.0
    %413 = vmatpush.msra.mxu0 0.0
    %414 = vmatpush.msra.mxu0 0.0
    %415 = vmatpush.msra.mxu0 0.0
    %416 = vmatpush.msra.mxu0 0.0
    %417 = vmatpush.msra.mxu0 %v314
    %418 = vmatpush.msra.mxu0 %v311
    %419 = vmatpush.msra.mxu0 %v308
    %420 = vmatpush.msra.mxu0 %v305
    %421 = vmatmul.f32.gmra.mxu0 %v336
    %v422 = vpop.f32.mrf.mxu0
    %v423 = vadd.f32 %v321, %v422
    %424 = vmatmul.f32.gmra.mxu0 %v339
    %v425 = vpop.f32.mrf.mxu0
    %v426 = vadd.f32 %v325, %v425
    %427 = vmatmul.f32.gmra.mxu0 %v342
    %v428 = vpop.f32.mrf.mxu0
    %v429 = vadd.f32 %v329, %v428
    %430 = vmatmul.f32.gmra.mxu0 %v345
    %v431 = vpop.f32.mrf.mxu0
    %v432 = vadd.f32 %v333, %v431
    %433 = vdwg.mxu0
    %v434 = vmax.f32 %v365, 0.0
    %v435 = vmax.f32 %v394, 0.0
    %v436 = vmax.f32 %v423, 0.0
    %v437 = vmax.f32 %v368, 0.0
    %v438 = vmax.f32 %v397, 0.0
    %v439 = vmax.f32 %v426, 0.0
    %v440 = vmax.f32 %v371, 0.0
    %v441 = vmax.f32 %v400, 0.0
    %v442 = vmax.f32 %v429, 0.0
    %v443 = vmax.f32 %v374, 0.0
    %v444 = vmax.f32 %v403, 0.0
    %v445 = vmax.f32 %v432, 0.0
    %446 = vset.pattern.permute.xlu0 3
    %447 = vperm.xlu0 %446, %v43
    %v448 = vpop.permute.xlu0 %447
    %450 = vset.pattern.permute.xlu0 3
    %451 = vperm.xlu0 %450, %v44
    %v452 = vpop.permute.xlu0 %451
    %454 = vset.pattern.permute.xlu0 3
    %455 = vperm.xlu0 %454, %v45
    %v456 = vpop.permute.xlu0 %455
    %458 = vset.pattern.permute.xlu0 3
    %459 = vperm.xlu0 %458, %v46
    %v460 = vpop.permute.xlu0 %459
    %v462 = vmul.f32 %v434, %v448
    %v463 = vmul.f32 %v435, %v448
    %v464 = vmul.f32 %v436, %v448
    %v465 = vmul.f32 %v437, %v452
    %v466 = vmul.f32 %v438, %v452
    %v467 = vmul.f32 %v439, %v452
    %v468 = vmul.f32 %v440, %v456
    %v469 = vmul.f32 %v441, %v456
    %v470 = vmul.f32 %v442, %v456
    %v471 = vmul.f32 %v443, %v460
    %v472 = vmul.f32 %v444, %v460
    %v473 = vmul.f32 %v445, %v460
    %v474 = vadd.f32 %v462, %v465
    %v475 = vadd.f32 %v474, %v468
    %v476 = vadd.f32 %v475, %v471
    %v477 = vrot.slane %v476, 4
    %v478 = vadd.f32 %v476, %v477
    %v479 = vrot.slane %v478, 2
    %v480 = vadd.f32 %v478, %v479
    %v481 = vrot.slane %v480, 1
    %v482 = vadd.f32 %v480, %v481
    %v483 = vadd.f32 %v463, %v466
    %v484 = vadd.f32 %v483, %v469
    %v485 = vadd.f32 %v484, %v472
    %v486 = vrot.slane %v485, 4
    %v487 = vadd.f32 %v485, %v486
    %v488 = vrot.slane %v487, 2
    %v489 = vadd.f32 %v487, %v488
    %v490 = vrot.slane %v489, 1
    %v491 = vadd.f32 %v489, %v490
    %v492 = vadd.f32 %v464, %v467
    %v493 = vadd.f32 %v492, %v470
    %v494 = vadd.f32 %v493, %v473
    %v495 = vrot.slane %v494, 4
    %v496 = vadd.f32 %v494, %v495
    %v497 = vrot.slane %v496, 2
    %v498 = vadd.f32 %v496, %v497
    %v499 = vrot.slane %v498, 1
    %v500 = vadd.f32 %v498, %v499
    %501 = vset.pattern.permute.xlu0 4
    %502 = vperm.xlu0 %501, %v43
    %v503 = vpop.permute.xlu0 %502
    %v505 = vadd.f32 %v482, %v503
    %v506 = vadd.f32 %v491, %v503
    %v507 = vadd.f32 %v500, %v503
    %v508 = vxor.u32 %v505, 2147483648
    %v509 = vxor.u32 %v506, 2147483648
    %v510 = vxor.u32 %v507, 2147483648
    %v511 = vmul.f32 %v508, 1.442695
    %v512 = vpow.pop %v511
    %v513 = vmul.f32 %v509, 1.442695
    %v514 = vpow.pop %v513
    %v515 = vmul.f32 %v510, 1.442695
    %v516 = vpow.pop %v515
    %v517 = vadd.f32 %v512, 1.0
    %v518 = vadd.f32 %v514, 1.0
    %v519 = vadd.f32 %v516, 1.0
    %v520 = vrcp.pop %v517
    %v521 = vmul.f32 %v517, %v520
    %v522 = vsub.f32 1.0, %v521
    %v523 = vmul.f32 %v520, %v522
    %v524 = vadd.f32 %v520, %v523
    %vm525 = vweird.f32 %v517
    %vm526 = vweird.f32 %v520
    %vm527 = vmor %vm525, %vm526
    %v528 = vsel %vm527, %v520, %v524
    %v529 = vand.u32 2147483647, %v517
    %vm530 = vcmp.eq.f32.partialorder %v529, 8.507059e+37
    %v531 = vand.u32 %v517, 2147483648
    %v532 = vor.u32 1.1754944e-38, %v531
    %v533 = vsel %vm530, %v532, %v528
    %v534 = vmul.f32 1.0, %v533
    %v535 = vrcp.pop %v518
    %v536 = vmul.f32 %v518, %v535
    %v537 = vsub.f32 1.0, %v536
    %v538 = vmul.f32 %v535, %v537
    %v539 = vadd.f32 %v535, %v538
    %vm540 = vweird.f32 %v518
    %vm541 = vweird.f32 %v535
    %vm542 = vmor %vm540, %vm541
    %v543 = vsel %vm542, %v535, %v539
    %v544 = vand.u32 2147483647, %v518
    %vm545 = vcmp.eq.f32.partialorder %v544, 8.507059e+37
    %v546 = vand.u32 %v518, 2147483648
    %v547 = vor.u32 1.1754944e-38, %v546
    %v548 = vsel %vm545, %v547, %v543
    %v549 = vmul.f32 1.0, %v548
    %v550 = vrcp.pop %v519
    %v551 = vmul.f32 %v519, %v550
    %v552 = vsub.f32 1.0, %v551
    %v553 = vmul.f32 %v550, %v552
    %v554 = vadd.f32 %v550, %v553
    %vm555 = vweird.f32 %v519
    %vm556 = vweird.f32 %v550
    %vm557 = vmor %vm555, %vm556
    %v558 = vsel %vm557, %v550, %v554
    %v559 = vand.u32 2147483647, %v519
    %vm560 = vcmp.eq.f32.partialorder %v559, 8.507059e+37
    %v561 = vand.u32 %v519, 2147483648
    %v562 = vor.u32 1.1754944e-38, %v561
    %v563 = vsel %vm560, %v562, %v558
    %v564 = vmul.f32 1.0, %v563
    %v568 = vrot.slane %v549, 7
    %v569 = vrot.slane %v564, 6
    %vm570 = vcmask 1040384
    %v571 = vsel %vm570, %v534, %v568
    %vm572 = vcmask 1041408
    %v573 = vsel %vm572, %v571, %v569
    %v575 = vlaneseq
    %vm576 = vcmp.ge.s32.totalorder %v575, 0
    %vm577 = vcmp.lt.s32.totalorder %v575, 384
    %vm578 = vmand %vm576, %vm577
    %579 = vst.msk [vmem:[#allocation5] sm:$0x7] %vm578, %v573
    // Predicated region
    $region26: #{tpu_custom_call.1} parent=1 // pred_check
      _
    $region27: #{tpu_custom_call.1} parent=1 // pred_check_branch
      %581 = sbr.rel (0) target = $region29
    $region28: #{tpu_custom_call.1} parent=1 // pred_region
      %583 = vsyncadd [#allocation4], 0
      %s585 = sshll.u32 [#allocation5], 4
      %s586 = int_to_ptr.vmem [resolvable:$true] %s585
      %s587 = sshll.u32 %s5, 4
      %s588 = int_to_ptr.hbm [resolvable:$true] %s587
      %590 = dma.vmem_to_hbm [thread:$0]  %s586, 48, %s588, [#allocation4]
    $region29: #{tpu_custom_call.1} parent=1 // pred_fallthru
      _
    // Predicated region
    $region30: #{tpu_custom_call.1} parent=1 // pred_check
      _
    $region31: #{tpu_custom_call.1} parent=1 // pred_check_branch
      %592 = sbr.rel (0) target = $region33
    $region32: #{tpu_custom_call.1} parent=1 // pred_region
      %594 = dma.done [#allocation4], 48
    $region33: #{tpu_custom_call.1} parent=1 // pred_fallthru
      _
    %595 = vsyncpa [#allocation3], 1
    %596 = vsyncpa [#allocation4], 1

</llo_original>
